<compile_context>
chip_gen: v7x
topology: tpu7x:2x2x1
jax: 0.10.0
libtpu: 0.0.40
codegen_flags: <defaults>
</compile_context>

<pallas_src>
import functools

import jax
import jax.numpy as jnp
from jax import lax
from jax.experimental import pallas as pl
from jax.experimental.pallas import tpu as pltpu

_LANES = 128
_SUBLANES = 8


def _cdiv(a, b):
    return -(-a // b)


def _wbce_elem_sum(x, y, pos):
    """Plain-JAX sum of stable weighted-BCE elements (used for the ragged tail)."""
    x = x.astype(jnp.float32)
    y = y.astype(jnp.float32)
    sp_negx = jnp.log1p(jnp.exp(-jnp.abs(x))) + jnp.maximum(-x, 0.0)
    w = pos * y + (1.0 - y)
    return jnp.sum(w * sp_negx + (1.0 - y) * x)


def _default_num_cores():
    # Only v7x-class chips have 2 TensorCores per chip; v5e/v6e have 1, where
    # a parallel axis only creates a redundant clamped tile of wasted DMA.
    try:
        kind = jax.devices()[0].device_kind.lower()
    except Exception:
        return 1
    return 2 if "v7" in kind else 1


def _wbce_kernel(pos_ref, x_ref, y_ref, out_ref, acc_ref, *, valid_rows, tile_rows):
    p = pl.program_id(0)          # parallel (multi-TC) axis
    j = pl.program_id(1)          # reduction-carry axis
    nj = pl.num_programs(1)

    @pl.when(j == 0)
    def _():
        acc_ref[...] = jnp.zeros_like(acc_ref)

    x = x_ref[...].astype(jnp.float32)
    y = y_ref[...].astype(jnp.float32)
    pos = pos_ref[0]              # f32 scalar from SMEM

    # numerically-stable softplus(-x) = log1p(exp(-|x|)) + max(-x, 0)
    sp_negx = jnp.log1p(jnp.exp(-jnp.abs(x))) + jnp.maximum(-x, 0.0)
    w = pos * y + (1.0 - y)
    loss = w * sp_negx + (1.0 - y) * x

    groups = tile_rows // _SUBLANES

    # Per-tile scalar row limit: number of valid rows in this tile.
    # <= 0 for clamped redundant tiles on the parallel axis.
    tile_linear = p * nj + j
    limit_rows = valid_rows - tile_linear * tile_rows

    @pl.when(limit_rows >= tile_rows)      # hot path: fully valid tile, no mask
    def _():
        acc_ref[...] += loss.reshape(groups, _SUBLANES, _LANES).sum(axis=0)

    @pl.when(limit_rows < tile_rows)       # cold path: partial / redundant tile
    def _():
        row_ids = lax.broadcasted_iota(jnp.int32, loss.shape, 0)
        masked = jnp.where(row_ids < limit_rows, loss, 0.0)
        acc_ref[...] += masked.reshape(groups, _SUBLANES, _LANES).sum(axis=0)

    @pl.when(j == nj - 1)
    def _():
        out_ref[...] = jnp.sum(acc_ref[...]).reshape(1, 1, 1)


def wbce_loss(output, target, pos_factor, *, tile_rows=2048, num_cores=None):
    """Weighted BCE-with-logits with mean reduction (scalar f32 result)."""
    assert output.shape == target.shape
    n = output.size
    assert n > 0

    if num_cores is None:
        num_cores = _default_num_cores()

    pos = jnp.asarray(pos_factor, dtype=jnp.float32)

    x = output.reshape(-1)
    y = target.reshape(-1)

    # Kernel consumes the (8*128)-aligned prefix; the <1024-element ragged
    # tail is summed with plain JAX (avoids a full-array pad/copy in HBM).
    rows = (n // (_SUBLANES * _LANES)) * _SUBLANES
    n_kern = rows * _LANES

    tail_sum = jnp.float32(0.0)
    if n_kern < n:
        tail_sum = _wbce_elem_sum(x[n_kern:], y[n_kern:], pos)

    if rows == 0:
        # Input smaller than one (8,128) tile: plain JAX already covered it.
        return tail_sum / jnp.float32(n)

    xk = x[:n_kern].reshape(rows, _LANES)
    yk = y[:n_kern].reshape(rows, _LANES)

    tr = min(int(tile_rows), rows)
    tr = max((tr // _SUBLANES) * _SUBLANES, _SUBLANES)
    num_tiles = _cdiv(rows, tr)
    P = num_cores if num_tiles >= num_cores else 1
    J = _cdiv(num_tiles, P)

    def in_map(p, j, pos_ref):
        # Clamp so redundant grid steps re-read a valid tile; the kernel masks
        # their contribution to zero via the per-tile row limit.
        return (jnp.minimum(p * J + j, num_tiles - 1), 0)

    kernel = functools.partial(_wbce_kernel, valid_rows=rows, tile_rows=tr)

    # Double-buffered inputs + single-vreg accumulator; generous headroom.
    vmem_needed = 2 * tr * _LANES * (xk.dtype.itemsize + yk.dtype.itemsize)
    vmem_limit = min(int(vmem_needed) + (8 << 20), 48 << 20)

    cost = pl.CostEstimate(
        flops=12 * n_kern,
        transcendentals=2 * n_kern,
        bytes_accessed=n_kern * (xk.dtype.itemsize + yk.dtype.itemsize) + 4 * P,
    )

    partial_sums = pl.pallas_call(
        kernel,
        out_shape=jax.ShapeDtypeStruct((P, 1, 1), jnp.float32),
        grid_spec=pltpu.PrefetchScalarGridSpec(
            num_scalar_prefetch=1,
            grid=(P, J),
            in_specs=[
                pl.BlockSpec((tr, _LANES), in_map),
                pl.BlockSpec((tr, _LANES), in_map),
            ],
            out_specs=pl.BlockSpec((1, 1, 1), lambda p, j, pos_ref: (p, 0, 0)),
            scratch_shapes=[pltpu.VMEM((_SUBLANES, _LANES), jnp.float32)],
        ),
        compiler_params=pltpu.CompilerParams(
            dimension_semantics=("parallel", "arbitrary"),
            vmem_limit_bytes=vmem_limit,
        ),
        cost_estimate=cost,
    )(pos.reshape(1), xk, yk)

    return (jnp.sum(partial_sums) + tail_sum) / jnp.float32(n)


def _wbce_ref(output, target, pos_factor):
    x = output.astype(jnp.float32)
    y = target.astype(jnp.float32)
    sp_negx = jnp.log1p(jnp.exp(-jnp.abs(x))) + jnp.maximum(-x, 0.0)
    w = jnp.float32(pos_factor) * y + (1.0 - y)
    return jnp.mean(w * sp_negx + (1.0 - y) * x)


if __name__ == "__main__":
    pos_factor = 3.0  # deterministic "parameter" (pos_weight scalar)

    key = jax.random.PRNGKey(0)
    k1, k2, k3, k4, k5, k6 = jax.random.split(key, 6)

    # --- Small NCHW case (module-consistent shapes) ---
    out_small = jax.random.normal(k1, (2, 4, 16, 16), dtype=jnp.float32)
    tgt_small = (jax.random.uniform(k2, (2, 4, 16, 16)) > 0.5).astype(jnp.float32)
    loss = jax.block_until_ready(wbce_loss(out_small, tgt_small, pos_factor))
    ref = _wbce_ref(out_small, tgt_small, pos_factor)
    assert jnp.allclose(loss, ref, rtol=1e-5, atol=1e-6), (loss, ref)

    # --- bf16 streaming case (native-dtype inputs, f32 math in-kernel) ---
    out_bf16 = out_small.astype(jnp.bfloat16)
    tgt_bf16 = tgt_small.astype(jnp.bfloat16)
    loss_bf16 = jax.block_until_ready(wbce_loss(out_bf16, tgt_bf16, pos_factor))
    ref_bf16 = _wbce_ref(out_bf16, tgt_bf16, pos_factor)
    assert jnp.allclose(loss_bf16, ref_bf16, rtol=1e-5, atol=1e-6), (loss_bf16, ref_bf16)

    # --- Larger case, default tiling / auto core count ---
    out_big = jax.random.normal(k3, (2, 4, 128, 160), dtype=jnp.float32)
    tgt_big = (jax.random.uniform(k4, (2, 4, 128, 160)) > 0.5).astype(jnp.float32)
    loss_big = jax.block_until_ready(wbce_loss(out_big, tgt_big, pos_factor))
    ref_big = _wbce_ref(out_big, tgt_big, pos_factor)
    assert jnp.allclose(loss_big, ref_big, rtol=1e-4, atol=1e-6), (loss_big, ref_big)

    # --- Case exercising multi-tile grid, parallel axis with a redundant
    #     clamped tile, the masked partial last tile, and the ragged tail ---
    out_rag = jax.random.normal(k5, (2, 4, 96, 130), dtype=jnp.float32)
    tgt_rag = (jax.random.uniform(k6, (2, 4, 96, 130)) > 0.5).astype(jnp.float32)
    loss_rag = jax.block_until_ready(
        wbce_loss(out_rag, tgt_rag, pos_factor, tile_rows=128, num_cores=2))
    ref_rag = _wbce_ref(out_rag, tgt_rag, pos_factor)
    assert jnp.allclose(loss_rag, ref_rag, rtol=1e-4, atol=1e-6), (loss_rag, ref_rag)

    print("KERNEL_OK")
</pallas_src>

<mosaic_0001>
module attributes {stable_mosaic.version = 11 : i64} {
  func.func @_wbce_kernel(%arg0: i32, %arg1: i32, %arg2: memref<1xf32, #tpu.memory_space<smem>>, %arg3: memref<16x128xf32, #tpu.memory_space<vmem>>, %arg4: memref<16x128xf32, #tpu.memory_space<vmem>>, %arg5: memref<1x1x1xf32, #tpu.memory_space<vmem>>, %arg6: memref<8x128xf32, #tpu.memory_space<vmem>>) attributes {dimension_semantics = [#tpu.dimension_semantics<parallel>, #tpu.dimension_semantics<arbitrary>], iteration_bounds = array<i64: 1, 1>, scalar_prefetch = 1 : i64, scratch_operands = 1 : i64, tpu.core_type = #tpu.core_type<tc>, window_params = [{transform_indices = @transform_0, window_bounds = array<i64: 16, 128>}, {transform_indices = @transform_1, window_bounds = array<i64: 16, 128>}, {transform_indices = @transform_2, window_bounds = array<i64: 1, 1, 1>}]} {
    %c0_i32 = arith.constant 0 : i32
    %0 = arith.cmpi eq, %arg1, %c0_i32 : i32
    %1 = arith.extui %0 : i1 to i32
    %c0_i32_0 = arith.constant 0 : i32
    %2 = arith.cmpi ne, %1, %c0_i32_0 : i32
    scf.if %2 {
      %cst_16 = arith.constant 0.000000e+00 : f32
      %39 = vector.broadcast %cst_16 : f32 to vector<8x128xf32>
      %c0_17 = arith.constant 0 : index
      %c0_18 = arith.constant 0 : index
      %40 = vector.load %arg6[%c0_17, %c0_18] : memref<8x128xf32, #tpu.memory_space<vmem>>, vector<8x128xf32>
      tpu.vector_store %arg6[%c0_17, %c0_18], %39 {strides = array<i32>} : memref<8x128xf32, #tpu.memory_space<vmem>>, vector<8x128xf32>,
    } else {
    }
    %c0 = arith.constant 0 : index
    %c0_1 = arith.constant 0 : index
    %3 = vector.load %arg3[%c0, %c0_1] : memref<16x128xf32, #tpu.memory_space<vmem>>, vector<16x128xf32>
    %c0_2 = arith.constant 0 : index
    %c0_3 = arith.constant 0 : index
    %4 = vector.load %arg4[%c0_2, %c0_3] : memref<16x128xf32, #tpu.memory_space<vmem>>, vector<16x128xf32>
    %c0_4 = arith.constant 0 : index
    %5 = memref.load %arg2[%c0_4] : memref<1xf32, #tpu.memory_space<smem>>
    %6 = math.absf %3 : vector<16x128xf32>
    %cst = arith.constant 0.000000e+00 : f32
    %7 = vector.broadcast %cst : f32 to vector<16x128xf32>
    %8 = arith.subf %7, %6 : vector<16x128xf32>
    %9 = math.exp %8 : vector<16x128xf32>
    %10 = math.log1p %9 : vector<16x128xf32>
    %cst_5 = arith.constant 0.000000e+00 : f32
    %11 = vector.broadcast %cst_5 : f32 to vector<16x128xf32>
    %12 = arith.subf %11, %3 : vector<16x128xf32>
    %cst_6 = arith.constant 0.000000e+00 : f32
    %13 = vector.broadcast %cst_6 : f32 to vector<16x128xf32>
    %14 = arith.maximumf %12, %13 : vector<16x128xf32>
    %15 = arith.addf %10, %14 : vector<16x128xf32>
    %16 = vector.broadcast %5 : f32 to vector<16x128xf32>
    %17 = arith.mulf %16, %4 : vector<16x128xf32>
    %cst_7 = arith.constant 1.000000e+00 : f32
    %18 = vector.broadcast %cst_7 : f32 to vector<16x128xf32>
    %19 = arith.subf %18, %4 : vector<16x128xf32>
    %20 = arith.addf %17, %19 : vector<16x128xf32>
    %21 = arith.mulf %20, %15 : vector<16x128xf32>
    %cst_8 = arith.constant 1.000000e+00 : f32
    %22 = vector.broadcast %cst_8 : f32 to vector<16x128xf32>
    %23 = arith.subf %22, %4 : vector<16x128xf32>
    %24 = arith.mulf %23, %3 : vector<16x128xf32>
    %25 = arith.addf %21, %24 : vector<16x128xf32>
    %c1_i32 = arith.constant 1 : i32
    %26 = arith.muli %arg0, %c1_i32 : i32
    %27 = arith.addi %26, %arg1 : i32
    %c16_i32 = arith.constant 16 : i32
    %28 = arith.muli %27, %c16_i32 : i32
    %c16_i32_9 = arith.constant 16 : i32
    %29 = arith.subi %c16_i32_9, %28 : i32
    %c16_i32_10 = arith.constant 16 : i32
    %30 = arith.cmpi sge, %29, %c16_i32_10 : i32
    %31 = arith.extui %30 : i1 to i32
    %c0_i32_11 = arith.constant 0 : i32
    %32 = arith.cmpi ne, %31, %c0_i32_11 : i32
    scf.if %32 {
      %c0_16 = arith.constant 0 : index
      %c0_17 = arith.constant 0 : index
      %39 = vector.load %arg6[%c0_16, %c0_17] : memref<8x128xf32, #tpu.memory_space<vmem>>, vector<8x128xf32>
      %40 = vector.shape_cast %25 : vector<16x128xf32> to vector<2x8x128xf32>
      %cst_18 = arith.constant dense<0.000000e+00> : vector<8x128xf32>
      %41 = vector.multi_reduction <add>, %40, %cst_18 [0] : vector<2x8x128xf32> to vector<8x128xf32>
      %42 = arith.addf %39, %41 : vector<8x128xf32>
      %c0_19 = arith.constant 0 : index
      %c0_20 = arith.constant 0 : index
      %43 = vector.load %arg6[%c0_19, %c0_20] : memref<8x128xf32, #tpu.memory_space<vmem>>, vector<8x128xf32>
      tpu.vector_store %arg6[%c0_19, %c0_20], %42 {strides = array<i32>} : memref<8x128xf32, #tpu.memory_space<vmem>>, vector<8x128xf32>,
    } else {
    }
    %c16_i32_12 = arith.constant 16 : i32
    %33 = arith.cmpi slt, %29, %c16_i32_12 : i32
    %34 = arith.extui %33 : i1 to i32
    %c0_i32_13 = arith.constant 0 : i32
    %35 = arith.cmpi ne, %34, %c0_i32_13 : i32
    scf.if %35 {
      %39 = tpu.iota {dimensions = array<i32: 0>} : vector<16x128xi32>
      %40 = vector.broadcast %29 : i32 to vector<16x128xi32>
      %41 = arith.cmpi slt, %39, %40 : vector<16x128xi32>
      %cst_16 = arith.constant 0.000000e+00 : f32
      %42 = vector.broadcast %cst_16 : f32 to vector<16x128xf32>
      %43 = arith.select %41, %25, %42 : vector<16x128xi1>, vector<16x128xf32>
      %c0_17 = arith.constant 0 : index
      %c0_18 = arith.constant 0 : index
      %44 = vector.load %arg6[%c0_17, %c0_18] : memref<8x128xf32, #tpu.memory_space<vmem>>, vector<8x128xf32>
      %45 = vector.shape_cast %43 : vector<16x128xf32> to vector<2x8x128xf32>
      %cst_19 = arith.constant dense<0.000000e+00> : vector<8x128xf32>
      %46 = vector.multi_reduction <add>, %45, %cst_19 [0] : vector<2x8x128xf32> to vector<8x128xf32>
      %47 = arith.addf %44, %46 : vector<8x128xf32>
      %c0_20 = arith.constant 0 : index
      %c0_21 = arith.constant 0 : index
      %48 = vector.load %arg6[%c0_20, %c0_21] : memref<8x128xf32, #tpu.memory_space<vmem>>, vector<8x128xf32>
      tpu.vector_store %arg6[%c0_20, %c0_21], %47 {strides = array<i32>} : memref<8x128xf32, #tpu.memory_space<vmem>>, vector<8x128xf32>,
    } else {
    }
    %c0_i32_14 = arith.constant 0 : i32
    %36 = arith.cmpi eq, %arg1, %c0_i32_14 : i32
    %37 = arith.extui %36 : i1 to i32
    %c0_i32_15 = arith.constant 0 : i32
    %38 = arith.cmpi ne, %37, %c0_i32_15 : i32
    scf.if %38 {
      %c0_16 = arith.constant 0 : index
      %c0_17 = arith.constant 0 : index
      %39 = vector.load %arg6[%c0_16, %c0_17] : memref<8x128xf32, #tpu.memory_space<vmem>>, vector<8x128xf32>
      %40 = vector.shape_cast %39 : vector<8x128xf32> to vector<1x8x128xf32>
      %cst_18 = arith.constant dense<0.000000e+00> : vector<1xf32>
      %41 = vector.multi_reduction <add>, %40, %cst_18 [1, 2] : vector<1x8x128xf32> to vector<1xf32>
      %42 = vector.shape_cast %41 : vector<1xf32> to vector<1x1x1xf32>
      %43 = vector.extract %42[0, 0, 0] : f32 from vector<1x1x1xf32>
      %44 = vector.broadcast %43 : f32 to vector<1x1x1xf32>
      %c0_19 = arith.constant 0 : index
      %c0_20 = arith.constant 0 : index
      %c0_21 = arith.constant 0 : index
      %45 = vector.load %arg5[%c0_19, %c0_20, %c0_21] : memref<1x1x1xf32, #tpu.memory_space<vmem>>, vector<1x1x1xf32>
      tpu.vector_store %arg5[%c0_19, %c0_20, %c0_21], %44 {strides = array<i32>} : memref<1x1x1xf32, #tpu.memory_space<vmem>>, vector<1x1x1xf32>,
    } else {
    }
    return
  }
  func.func @transform_0(%arg0: i32, %arg1: i32, %arg2: memref<1xf32, #tpu.memory_space<smem>>) -> (i32, i32) {
    %c1_i32 = arith.constant 1 : i32
    %0 = arith.muli %arg0, %c1_i32 : i32
    %1 = arith.addi %0, %arg1 : i32
    %c0_i32 = arith.constant 0 : i32
    %2 = arith.minsi %1, %c0_i32 : i32
    %c0_i32_0 = arith.constant 0 : i32
    %c0_i32_1 = arith.constant 0 : i32
    return %2, %c0_i32_0 : i32, i32
  }
  func.func @transform_1(%arg0: i32, %arg1: i32, %arg2: memref<1xf32, #tpu.memory_space<smem>>) -> (i32, i32) {
    %c1_i32 = arith.constant 1 : i32
    %0 = arith.muli %arg0, %c1_i32 : i32
    %1 = arith.addi %0, %arg1 : i32
    %c0_i32 = arith.constant 0 : i32
    %2 = arith.minsi %1, %c0_i32 : i32
    %c0_i32_0 = arith.constant 0 : i32
    %c0_i32_1 = arith.constant 0 : i32
    return %2, %c0_i32_0 : i32, i32
  }
  func.func @transform_2(%arg0: i32, %arg1: i32, %arg2: memref<1xf32, #tpu.memory_space<smem>>) -> (i32, i32, i32) {
    %c0_i32 = arith.constant 0 : i32
    %c0_i32_0 = arith.constant 0 : i32
    %c0_i32_1 = arith.constant 0 : i32
    return %arg0, %c0_i32, %c0_i32_0 : i32, i32, i32
  }
}

</mosaic_0001>

<llo_original>
// kernel: tpu_custom_call.1
$region0: #{tpu_custom_call.1}
  #allocation0 [shape = 'u32[]', space=smem, size = 0x4, offset = 0x4, fixed_abs, tag = 'smem constant byte address 0x4 - core index']
  #allocation1 [shape = 'u32[144,128]{1,0:T(1,128)}', space=vmem, size = 0x12000, scoped, tag = 'internal scratch']
  #allocation2 [shape = 'f32[8,128]{1,0:T(8,128)}', space=vmem, size = 0x1000, scoped, tag = 'scratch operand']
  #allocation3 [shape = 's32[1]{0}', space=sflag, size = 0x4, scoped, tag = 'scoped memory for tpu_custom_call.1']
  #allocation4 [shape = 'f32[1]{0:T(128)S(6)}', space=smem, size = 0x200, scoped, tag = 'prefetched SMEM operand 0']
  %s0 = inlined_call_operand.<no memory space> [shape: f32[1], index: 0, kind: input, shape index: {}]
  %s1 = inlined_call_operand.hbm [shape: f32[16,128], index: 1, kind: input, shape index: {}]
  %s2 = inlined_call_operand.hbm [shape: f32[16,128], index: 2, kind: input, shape index: {}]
  %s3 = inlined_call_operand.hbm [shape: f32[1,1,1], index: 3, kind: output, shape index: {}]
  %s4 = sld [smem:[#allocation0]]
  $region42: #{tpu_custom_call.1} parent=0
    _
  %s6 = ssub.s32 1, %s4
  %s7 = scalar_select 0, %s6, %s4
  %8 = sst [smem:[#allocation4]] %s0
  $region1: #{tpu_custom_call.1} parent=0
    #allocation5 [shape = 'u8[8192]{0}', space=vmem, size = 0x2000, scoped, tag = 'input window, operand 1, single buffered']
    #allocation6 [shape = 's32[1]{0}', space=sflag, size = 0x4, scoped, tag = 'scoped memory for tpu_custom_call.1']
    #allocation7 [shape = 's32[1]{0}', space=sflag, size = 0x4, scoped, tag = 'scoped memory for tpu_custom_call.1']
    #allocation8 [shape = 'u8[8192]{0}', space=vmem, size = 0x2000, scoped, tag = 'input window, operand 2, single buffered']
    #allocation9 [shape = 's32[1]{0}', space=sflag, size = 0x4, scoped, tag = 'scoped memory for tpu_custom_call.1']
    #allocation10 [shape = 'u8[512]{0}', space=vmem, size = 0x400, scoped, tag = 'output window, operand 0, single buffered']
    %9 = vsyncpa [#allocation6], 0
    %10 = vsyncpa [#allocation9], 0
    %11 = vsyncpa [#allocation7], 0
    // Predicated region
    $region2: #{tpu_custom_call.1} parent=1 // pred_check
      _
    $region3: #{tpu_custom_call.1} parent=1 // pred_check_branch
      %13 = sbr.rel (0) target = $region5
    $region4: #{tpu_custom_call.1} parent=1 // pred_region
      %s14 = sadd.s32 0, 0
      %p15 = scmp.lt.s32.totalorder %s14, 0
      %s16 = scalar_select %p15, %s14, 0
      %s17 = smul.u32 2, %s16
      %s19 = ssub.s32 256, 256
      %20 = vsyncadd [#allocation6], %s19
      %s21 = smul.addr %s17, 128
      %s22 = scalar_lea.hbm %s1, %s21
      %s23 = sshll.u32 [#allocation5], 4
      %s24 = int_to_ptr.vmem [resolvable:$true] %s23
      %29 = dma.hbm_to_vmem [thread:$0]  %s22, 256, %s24, [#allocation6], 128, 128, 8
    $region5: #{tpu_custom_call.1} parent=1 // pred_fallthru
      _
    // Predicated region
    $region6: #{tpu_custom_call.1} parent=1 // pred_check
      _
    $region7: #{tpu_custom_call.1} parent=1 // pred_check_branch
      %31 = sbr.rel (0) target = $region9
    $region8: #{tpu_custom_call.1} parent=1 // pred_region
      %s32 = sadd.s32 0, 0
      %p33 = scmp.lt.s32.totalorder %s32, 0
      %s34 = scalar_select %p33, %s32, 0
      %s35 = smul.u32 2, %s34
      %s37 = ssub.s32 256, 256
      %38 = vsyncadd [#allocation9], %s37
      %s39 = smul.addr %s35, 128
      %s40 = scalar_lea.hbm %s2, %s39
      %s41 = sshll.u32 [#allocation8], 4
      %s42 = int_to_ptr.vmem [resolvable:$true] %s41
      %47 = dma.hbm_to_vmem [thread:$0]  %s40, 256, %s42, [#allocation9], 128, 128, 8
    $region9: #{tpu_custom_call.1} parent=1 // pred_fallthru
      _
    // Predicated region
    $region10: #{tpu_custom_call.1} parent=1 // pred_check
      _
    $region11: #{tpu_custom_call.1} parent=1 // pred_check_branch
      %49 = sbr.rel (0) target = $region13
    $region12: #{tpu_custom_call.1} parent=1 // pred_region
      %50 = dma.done [#allocation6], 256
    $region13: #{tpu_custom_call.1} parent=1 // pred_fallthru
      _
    // Predicated region
    $region14: #{tpu_custom_call.1} parent=1 // pred_check
      _
    $region15: #{tpu_custom_call.1} parent=1 // pred_check_branch
      %52 = sbr.rel (0) target = $region17
    $region16: #{tpu_custom_call.1} parent=1 // pred_region
      %53 = dma.done [#allocation9], 256
    $region17: #{tpu_custom_call.1} parent=1 // pred_fallthru
      _
    %s54 = sadd.s32 0, 0
    %p55 = scmp.lt.s32.totalorder %s54, 0
    %s56 = scalar_select %p55, %s54, 0
    %s57 = smul.u32 2, %s56
    %s58 = sadd.s32 0, 0
    %p59 = scmp.lt.s32.totalorder %s58, 0
    %s60 = scalar_select %p59, %s58, 0
    %s61 = smul.u32 2, %s60
    %p62 = scmp.eq.s32.totalorder 0, 0
    // Predicated region
    $region18: #{tpu_custom_call.1} parent=1 // pred_check
      %p63 = pneg %p62
    $region19: #{tpu_custom_call.1} parent=1 // pred_check_branch
      %65 = sbr.rel (%p63) target = $region21
    $region20: #{tpu_custom_call.1} parent=1 // pred_region
      %66 = vst [vmem:[#allocation2] sm:$0xff] 0.0
    $region21: #{tpu_custom_call.1} parent=1 // pred_fallthru
      _
    %v67 = vld [vmem:[#allocation5] sm:$0xff]
    %v68 = vld [vmem:[#allocation5 + $0x8] sm:$0xff]
    %v69 = vld [vmem:[#allocation8] sm:$0xff]
    %v70 = vld [vmem:[#allocation8 + $0x8] sm:$0xff]
    %s71 = sld [smem:[#allocation4]]
    %v72 = vand.u32 2147483647, %v67
    %v73 = vand.u32 2147483647, %v68
    %v74 = vsub.f32 0.0, %v72
    %v75 = vsub.f32 0.0, %v73
    %v76 = vmul.f32 %v74, 1.442695
    %v77 = vpow.pop %v76
    %v78 = vmul.f32 %v75, 1.442695
    %v79 = vpow.pop %v78
    %v80 = vadd.f32 %v77, 1.0
    %v81 = vlog2.pop %v80
    %v82 = vmul.f32 %v81, 0.6931472
    %v83 = vmul.f32 -0.5, %v77
    %v84 = vadd.f32 %v83, 1.0
    %v85 = vmul.f32 %v84, %v77
    %v86 = vand.u32 2147483647, %v77
    %vm87 = vcmp.lt.f32.partialorder %v86, 0.0004427343
    %v88 = vsel %vm87, %v85, %v82
    %v89 = vadd.f32 %v79, 1.0
    %v90 = vlog2.pop %v89
    %v91 = vmul.f32 %v90, 0.6931472
    %v92 = vmul.f32 -0.5, %v79
    %v93 = vadd.f32 %v92, 1.0
    %v94 = vmul.f32 %v93, %v79
    %v95 = vand.u32 2147483647, %v79
    %vm96 = vcmp.lt.f32.partialorder %v95, 0.0004427343
    %v97 = vsel %vm96, %v94, %v91
    %v98 = vsub.f32 0.0, %v67
    %v99 = vsub.f32 0.0, %v68
    %v100 = vmax.f32 %v98, 0.0
    %v101 = vmax.f32 %v99, 0.0
    %v102 = vadd.f32 %v88, %v100
    %v103 = vadd.f32 %v97, %v101
    %v104 = vstv %s71
    %v105 = vmul.f32 %v104, %v69
    %v106 = vmul.f32 %v104, %v70
    %v107 = vsub.f32 1.0, %v69
    %v108 = vsub.f32 1.0, %v70
    %v109 = vadd.f32 %v105, %v107
    %v110 = vadd.f32 %v106, %v108
    %v111 = vmul.f32 %v109, %v102
    %v112 = vmul.f32 %v110, %v103
    %v113 = vmul.f32 %v107, %v67
    %v114 = vmul.f32 %v108, %v68
    %v115 = vadd.f32 %v111, %v113
    %v116 = vadd.f32 %v112, %v114
    %s117 = sadd.s32 0, 0
    %s118 = smul.u32 %s117, 16
    %s119 = ssub.s32 16, %s118
    %p120 = scmp.ge.s32.totalorder %s119, 16
    // Predicated region
    $region22: #{tpu_custom_call.1} parent=1 // pred_check
      %p121 = pneg %p120
    $region23: #{tpu_custom_call.1} parent=1 // pred_check_branch
      %123 = sbr.rel (%p121) target = $region25
    $region24: #{tpu_custom_call.1} parent=1 // pred_region
      %v124 = vld [vmem:[#allocation2] sm:$0xff]
      %v125 = vadd.f32 %v115, %v116
      %v126 = vadd.f32 %v124, %v125
      %127 = vst [vmem:[#allocation2] sm:$0xff] %v126
    $region25: #{tpu_custom_call.1} parent=1 // pred_fallthru
      _
    %p128 = scmp.lt.s32.totalorder %s119, 16
    // Predicated region
    $region26: #{tpu_custom_call.1} parent=1 // pred_check
      %p129 = pneg %p128
    $region27: #{tpu_custom_call.1} parent=1 // pred_check_branch
      %131 = sbr.rel (%p129) target = $region29
    $region28: #{tpu_custom_call.1} parent=1 // pred_region
      %v132 = vlaneseq
      %v133 = vshrl.u32 %v132, 7
      %v134 = vadd.s32 %v133, 8
      %v135 = vstv %s119
      %vm136 = vcmp.lt.s32.totalorder %v133, %v135
      %vm137 = vcmp.lt.s32.totalorder %v134, %v135
      %v138 = vsel %vm136, %v115, 0.0
      %v139 = vsel %vm137, %v116, 0.0
      %v140 = vld [vmem:[#allocation2] sm:$0xff]
      %v141 = vadd.f32 %v138, %v139
      %v142 = vadd.f32 %v140, %v141
      %143 = vst [vmem:[#allocation2] sm:$0xff] %v142
    $region29: #{tpu_custom_call.1} parent=1 // pred_fallthru
      _
    // Predicated region
    $region30: #{tpu_custom_call.1} parent=1 // pred_check
      %p144 = pneg %p62
    $region31: #{tpu_custom_call.1} parent=1 // pred_check_branch
      %146 = sbr.rel (%p144) target = $region33
    $region32: #{tpu_custom_call.1} parent=1 // pred_region
      %v147 = vld [vmem:[#allocation2] sm:$0xff]
      %148 = vadd.xlane.f32.xlu0 %v147
      %v149 = vpop.xlane.xlu0 %148
      %v150 = vrot.slane %v149, 4
      %v151 = vadd.f32 %v149, %v150
      %v152 = vrot.slane %v151, 2
      %v153 = vadd.f32 %v151, %v152
      %v154 = vrot.slane %v153, 1
      %v155 = vadd.f32 %v153, %v154
      %s156 = vtos %v155
      %v157 = vstv %s156
      %vm158 = vcmask 0
      %159 = vst.msk [vmem:[#allocation10] sm:$0x1] %vm158, %v157
    $region33: #{tpu_custom_call.1} parent=1 // pred_fallthru
      _
    // Predicated region
    $region34: #{tpu_custom_call.1} parent=1 // pred_check
      _
    $region35: #{tpu_custom_call.1} parent=1 // pred_check_branch
      %161 = sbr.rel (0) target = $region37
    $region36: #{tpu_custom_call.1} parent=1 // pred_region
      %s163 = ssub.s32 16, 16
      %164 = vsyncadd [#allocation7], %s163
      %s166 = sshll.u32 [#allocation10], 4
      %s167 = int_to_ptr.vmem [resolvable:$true] %s166
      %169 = dma.vmem_to_hbm [thread:$0]  %s167, 16, %s3, [#allocation7]
    $region37: #{tpu_custom_call.1} parent=1 // pred_fallthru
      _
    // Predicated region
    $region38: #{tpu_custom_call.1} parent=1 // pred_check
      _
    $region39: #{tpu_custom_call.1} parent=1 // pred_check_branch
      %171 = sbr.rel (0) target = $region41
    $region40: #{tpu_custom_call.1} parent=1 // pred_region
      %172 = dma.done [#allocation7], 16
    $region41: #{tpu_custom_call.1} parent=1 // pred_fallthru
      _
    %173 = vsyncpa [#allocation6], 1
    %174 = vsyncpa [#allocation9], 1
    %175 = vsyncpa [#allocation7], 1

</llo_original>
